<compile_context>
chip_gen: v7x
topology: tpu7x:2x2x1
jax: 0.10.0
libtpu: 0.0.40
codegen_flags: <defaults>
</compile_context>

<pallas_src>
import jax
import jax.numpy as jnp
from jax.experimental import pallas as pl
from jax.experimental.pallas import tpu as pltpu

LEAKY_SLOPE = 0.01   # PyTorch nn.LeakyReLU default negative_slope
HIDDEN = 256
OUT_PAD = 128        # lane-dense output width; real result lives in column 0


def _leaky_relu(x):
    return jnp.where(x > 0, x, LEAKY_SLOPE * x)


def _round_up(x, m):
    return ((x + m - 1) // m) * m


def value_net_kernel(state_ref, action_ref,
                     w1s_ref, w1a_ref, b1_ref,
                     w2_ref, b2_ref,
                     w3_ref, b3_ref,
                     o_ref):
    """Fused 3-layer MLP on one batch tile (weights VMEM-resident)."""
    # Layer 1: split-weight matmul (state half + action half) replaces the
    # HBM-level concat; bf16 MXU inputs, f32 accumulation.
    s = state_ref[...].astype(jnp.bfloat16)
    a = action_ref[...].astype(jnp.bfloat16)
    h1 = (jnp.dot(s, w1s_ref[...], preferred_element_type=jnp.float32)
          + jnp.dot(a, w1a_ref[...], preferred_element_type=jnp.float32)
          + b1_ref[...])
    h1 = _leaky_relu(h1)                                   # (TB, 256) f32

    # Layer 2
    h2 = jnp.dot(h1.astype(jnp.bfloat16), w2_ref[...],
                 preferred_element_type=jnp.float32) + b2_ref[...]
    h2 = _leaky_relu(h2)                                   # (TB, 256) f32

    # Layer 3: W3 zero-padded to 128 output lanes -> unmasked lane-dense store.
    out = jnp.dot(h2.astype(jnp.bfloat16), w3_ref[...],
                  preferred_element_type=jnp.float32) + b3_ref[...]
    o_ref[...] = out.astype(o_ref.dtype)                   # (TB, 128)


def value_network_forward(state, action, params, *, block_b=512):
    """state: (B, input_dim), action: (B, num_clients) -> (B, 1) fp32."""
    w1, b1, w2, b2, w3, b3 = params
    B, input_dim = state.shape
    _, num_clients = action.shape
    D = input_dim + num_clients

    # Batch tile: multiple of 8 (sublane), capped so per-tile VMEM stays small
    # enough for v7x's 64 MiB while still amortizing per-step overhead.
    TB = min(block_b, _round_up(B, 8))
    Bp = _round_up(B, TB)
    if Bp != B:
        state = jnp.pad(state, ((0, Bp - B), (0, 0)))
        action = jnp.pad(action, ((0, Bp - B), (0, 0)))

    # Prepare weights once: split W1, pad W3/b3 to 128 lane-dense output
    # columns (zeros, so they cannot leak into column 0), cast mats to bf16.
    w1s = w1[:input_dim].astype(jnp.bfloat16)              # (input_dim, 256)
    w1a = w1[input_dim:].astype(jnp.bfloat16)              # (num_clients, 256)
    w2b = w2.astype(jnp.bfloat16)                          # (256, 256)
    w3p = jnp.pad(w3, ((0, 0), (0, OUT_PAD - w3.shape[1]))).astype(jnp.bfloat16)
    b3p = jnp.pad(b3, ((0, 0), (0, OUT_PAD - b3.shape[1])))  # (1, 128) f32

    grid = (Bp // TB,)
    wspec = lambda shape: pl.BlockSpec(shape, lambda i: (0, 0))  # resident

    flops = 2 * Bp * (D * HIDDEN + HIDDEN * HIDDEN + HIDDEN * OUT_PAD)
    bytes_accessed = (Bp * D * 4 + Bp * OUT_PAD * 4
                      + 2 * (D * HIDDEN + HIDDEN * HIDDEN + HIDDEN * OUT_PAD)
                      + 4 * (2 * HIDDEN + OUT_PAD))

    out = pl.pallas_call(
        value_net_kernel,
        out_shape=jax.ShapeDtypeStruct((Bp, OUT_PAD), jnp.float32),
        grid=grid,
        in_specs=[
            pl.BlockSpec((TB, input_dim), lambda i: (i, 0)),
            pl.BlockSpec((TB, num_clients), lambda i: (i, 0)),
            wspec((input_dim, HIDDEN)),
            wspec((num_clients, HIDDEN)),
            wspec((1, HIDDEN)),
            wspec((HIDDEN, HIDDEN)),
            wspec((1, HIDDEN)),
            wspec((HIDDEN, OUT_PAD)),
            wspec((1, OUT_PAD)),
        ],
        out_specs=pl.BlockSpec((TB, OUT_PAD), lambda i: (i, 0)),
        compiler_params=pltpu.CompilerParams(
            dimension_semantics=("parallel",),
            vmem_limit_bytes=32 * 1024 * 1024,
        ),
        cost_estimate=pl.CostEstimate(
            flops=flops, transcendentals=0, bytes_accessed=bytes_accessed),
    )(state, action, w1s, w1a, b1, w2b, b2, w3p, b3p)

    return out[:B, :1]


def init_params(key, input_dim, num_clients, hidden=HIDDEN):
    """Deterministic synthetic init (uniform +-1/sqrt(fan_in), like torch Linear)."""
    d_in = input_dim + num_clients
    ks = jax.random.split(key, 6)

    def lin(kw, kb, fan_in, fan_out):
        bound = 1.0 / jnp.sqrt(fan_in)
        w = jax.random.uniform(kw, (fan_in, fan_out), jnp.float32, -bound, bound)
        b = jax.random.uniform(kb, (1, fan_out), jnp.float32, -bound, bound)
        return w, b

    w1, b1 = lin(ks[0], ks[1], d_in, hidden)
    w2, b2 = lin(ks[2], ks[3], hidden, hidden)
    w3, b3 = lin(ks[4], ks[5], hidden, 1)
    return (w1, b1, w2, b2, w3, b3)


def reference_forward(state, action, params):
    """Pure-JAX fp32 reference, matching the PyTorch module exactly."""
    x = jnp.concatenate([state, action], axis=1)
    w1, b1, w2, b2, w3, b3 = params
    h1 = _leaky_relu(x @ w1 + b1)
    h2 = _leaky_relu(h1 @ w2 + b2)
    return h2 @ w3 + b3


if __name__ == "__main__":
    key = jax.random.PRNGKey(0)
    k_state, k_action, k_params = jax.random.split(key, 3)

    batch = 8
    input_dim = 16
    num_clients = 8

    state = jax.random.normal(k_state, (batch, input_dim), jnp.float32)
    action = jax.random.normal(k_action, (batch, num_clients), jnp.float32)
    params = init_params(k_params, input_dim, num_clients)

    out = value_network_forward(state, action, params)
    out = jax.block_until_ready(out)

    ref = reference_forward(state, action, params)
    assert out.shape == (batch, 1), out.shape
    # bf16 MXU inputs with f32 accumulation -> small drift vs fp32 reference.
    assert jnp.allclose(out, ref, atol=3e-2, rtol=3e-2), "mismatch vs JAX reference"

    print("KERNEL_OK")
</pallas_src>

<mosaic_0001>
module attributes {stable_mosaic.version = 11 : i64} {
  func.func @value_net_kernel(%arg0: i32, %arg1: memref<8x16xf32, #tpu.memory_space<vmem>>, %arg2: memref<8x8xf32, #tpu.memory_space<vmem>>, %arg3: memref<16x256xbf16, #tpu.memory_space<vmem>>, %arg4: memref<8x256xbf16, #tpu.memory_space<vmem>>, %arg5: memref<1x256xf32, #tpu.memory_space<vmem>>, %arg6: memref<256x256xbf16, #tpu.memory_space<vmem>>, %arg7: memref<1x256xf32, #tpu.memory_space<vmem>>, %arg8: memref<256x128xbf16, #tpu.memory_space<vmem>>, %arg9: memref<1x128xf32, #tpu.memory_space<vmem>>, %arg10: memref<8x128xf32, #tpu.memory_space<vmem>>) attributes {dimension_semantics = [#tpu.dimension_semantics<parallel>], iteration_bounds = array<i64: 1>, scalar_prefetch = 0 : i64, scratch_operands = 0 : i64, tpu.core_type = #tpu.core_type<tc>, window_params = [{transform_indices = @transform_0, window_bounds = array<i64: 8, 16>}, {transform_indices = @transform_1, window_bounds = array<i64: 8, 8>}, {pipeline_mode = #tpu.pipeline_mode<synchronous>, transform_indices = @transform_2, window_bounds = array<i64: 16, 256>}, {pipeline_mode = #tpu.pipeline_mode<synchronous>, transform_indices = @transform_3, window_bounds = array<i64: 8, 256>}, {pipeline_mode = #tpu.pipeline_mode<synchronous>, transform_indices = @transform_4, window_bounds = array<i64: 1, 256>}, {pipeline_mode = #tpu.pipeline_mode<synchronous>, transform_indices = @transform_5, window_bounds = array<i64: 256, 256>}, {pipeline_mode = #tpu.pipeline_mode<synchronous>, transform_indices = @transform_6, window_bounds = array<i64: 1, 256>}, {pipeline_mode = #tpu.pipeline_mode<synchronous>, transform_indices = @transform_7, window_bounds = array<i64: 256, 128>}, {pipeline_mode = #tpu.pipeline_mode<synchronous>, transform_indices = @transform_8, window_bounds = array<i64: 1, 128>}, {transform_indices = @transform_9, window_bounds = array<i64: 8, 128>}]} {
    %c0 = arith.constant 0 : index
    %c0_0 = arith.constant 0 : index
    %0 = vector.load %arg1[%c0, %c0_0] : memref<8x16xf32, #tpu.memory_space<vmem>>, vector<8x16xf32>
    %1 = arith.truncf %0 : vector<8x16xf32> to vector<8x16xbf16>
    %c0_1 = arith.constant 0 : index
    %c0_2 = arith.constant 0 : index
    %2 = vector.load %arg2[%c0_1, %c0_2] : memref<8x8xf32, #tpu.memory_space<vmem>>, vector<8x8xf32>
    %3 = arith.truncf %2 : vector<8x8xf32> to vector<8x8xbf16>
    %c0_3 = arith.constant 0 : index
    %c0_4 = arith.constant 0 : index
    %4 = vector.load %arg3[%c0_3, %c0_4] : memref<16x256xbf16, #tpu.memory_space<vmem>>, vector<16x256xbf16>
    %cst = arith.constant dense<0.000000e+00> : vector<8x256xf32>
    %5 = tpu.matmul %1, %4, %cst {dimension_numbers = #tpu.dot_dimension_numbers<[1], [0], [0], [1], [0, 0, 1, 1], [], []>} : vector<8x16xbf16>, vector<16x256xbf16>, vector<8x256xf32> -> vector<8x256xf32>
    %c0_5 = arith.constant 0 : index
    %c0_6 = arith.constant 0 : index
    %6 = vector.load %arg4[%c0_5, %c0_6] : memref<8x256xbf16, #tpu.memory_space<vmem>>, vector<8x256xbf16>
    %cst_7 = arith.constant dense<0.000000e+00> : vector<8x256xf32>
    %7 = tpu.matmul %3, %6, %cst_7 {dimension_numbers = #tpu.dot_dimension_numbers<[1], [0], [0], [1], [0, 0, 1, 1], [], []>} : vector<8x8xbf16>, vector<8x256xbf16>, vector<8x256xf32> -> vector<8x256xf32>
    %8 = arith.addf %5, %7 : vector<8x256xf32>
    %c0_8 = arith.constant 0 : index
    %c0_9 = arith.constant 0 : index
    %9 = vector.load %arg5[%c0_8, %c0_9] : memref<1x256xf32, #tpu.memory_space<vmem>>, vector<1x256xf32>
    %10 = vector.broadcast %9 : vector<1x256xf32> to vector<8x256xf32>
    %11 = arith.addf %8, %10 : vector<8x256xf32>
    %cst_10 = arith.constant 0.000000e+00 : f32
    %12 = vector.broadcast %cst_10 : f32 to vector<8x256xf32>
    %13 = arith.cmpf ogt, %11, %12 : vector<8x256xf32>
    %cst_11 = arith.constant 0.00999999977 : f32
    %14 = vector.broadcast %cst_11 : f32 to vector<8x256xf32>
    %15 = arith.mulf %14, %11 : vector<8x256xf32>
    %16 = arith.select %13, %11, %15 : vector<8x256xi1>, vector<8x256xf32>
    %17 = arith.truncf %16 : vector<8x256xf32> to vector<8x256xbf16>
    %c0_12 = arith.constant 0 : index
    %c0_13 = arith.constant 0 : index
    %18 = vector.load %arg6[%c0_12, %c0_13] : memref<256x256xbf16, #tpu.memory_space<vmem>>, vector<256x256xbf16>
    %cst_14 = arith.constant dense<0.000000e+00> : vector<8x256xf32>
    %19 = tpu.matmul %17, %18, %cst_14 {dimension_numbers = #tpu.dot_dimension_numbers<[1], [0], [0], [1], [0, 0, 1, 1], [], []>} : vector<8x256xbf16>, vector<256x256xbf16>, vector<8x256xf32> -> vector<8x256xf32>
    %c0_15 = arith.constant 0 : index
    %c0_16 = arith.constant 0 : index
    %20 = vector.load %arg7[%c0_15, %c0_16] : memref<1x256xf32, #tpu.memory_space<vmem>>, vector<1x256xf32>
    %21 = vector.broadcast %20 : vector<1x256xf32> to vector<8x256xf32>
    %22 = arith.addf %19, %21 : vector<8x256xf32>
    %cst_17 = arith.constant 0.000000e+00 : f32
    %23 = vector.broadcast %cst_17 : f32 to vector<8x256xf32>
    %24 = arith.cmpf ogt, %22, %23 : vector<8x256xf32>
    %cst_18 = arith.constant 0.00999999977 : f32
    %25 = vector.broadcast %cst_18 : f32 to vector<8x256xf32>
    %26 = arith.mulf %25, %22 : vector<8x256xf32>
    %27 = arith.select %24, %22, %26 : vector<8x256xi1>, vector<8x256xf32>
    %28 = arith.truncf %27 : vector<8x256xf32> to vector<8x256xbf16>
    %c0_19 = arith.constant 0 : index
    %c0_20 = arith.constant 0 : index
    %29 = vector.load %arg8[%c0_19, %c0_20] : memref<256x128xbf16, #tpu.memory_space<vmem>>, vector<256x128xbf16>
    %cst_21 = arith.constant dense<0.000000e+00> : vector<8x128xf32>
    %30 = tpu.matmul %28, %29, %cst_21 {dimension_numbers = #tpu.dot_dimension_numbers<[1], [0], [0], [1], [0, 0, 1, 1], [], []>} : vector<8x256xbf16>, vector<256x128xbf16>, vector<8x128xf32> -> vector<8x128xf32>
    %c0_22 = arith.constant 0 : index
    %c0_23 = arith.constant 0 : index
    %31 = vector.load %arg9[%c0_22, %c0_23] : memref<1x128xf32, #tpu.memory_space<vmem>>, vector<1x128xf32>
    %32 = vector.broadcast %31 : vector<1x128xf32> to vector<8x128xf32>
    %33 = arith.addf %30, %32 : vector<8x128xf32>
    %c0_24 = arith.constant 0 : index
    %c0_25 = arith.constant 0 : index
    %34 = vector.load %arg10[%c0_24, %c0_25] : memref<8x128xf32, #tpu.memory_space<vmem>>, vector<8x128xf32>
    tpu.vector_store %arg10[%c0_24, %c0_25], %33 {strides = array<i32>} : memref<8x128xf32, #tpu.memory_space<vmem>>, vector<8x128xf32>,
    return
  }
  func.func @transform_0(%arg0: i32) -> (i32, i32) {
    %c0_i32 = arith.constant 0 : i32
    %c0_i32_0 = arith.constant 0 : i32
    return %arg0, %c0_i32 : i32, i32
  }
  func.func @transform_1(%arg0: i32) -> (i32, i32) {
    %c0_i32 = arith.constant 0 : i32
    %c0_i32_0 = arith.constant 0 : i32
    return %arg0, %c0_i32 : i32, i32
  }
  func.func @transform_2(%arg0: i32) -> (i32, i32) {
    %c0_i32 = arith.constant 0 : i32
    %c0_i32_0 = arith.constant 0 : i32
    %c0_i32_1 = arith.constant 0 : i32
    return %c0_i32, %c0_i32_0 : i32, i32
  }
  func.func @transform_3(%arg0: i32) -> (i32, i32) {
    %c0_i32 = arith.constant 0 : i32
    %c0_i32_0 = arith.constant 0 : i32
    %c0_i32_1 = arith.constant 0 : i32
    return %c0_i32, %c0_i32_0 : i32, i32
  }
  func.func @transform_4(%arg0: i32) -> (i32, i32) {
    %c0_i32 = arith.constant 0 : i32
    %c0_i32_0 = arith.constant 0 : i32
    %c0_i32_1 = arith.constant 0 : i32
    return %c0_i32, %c0_i32_0 : i32, i32
  }
  func.func @transform_5(%arg0: i32) -> (i32, i32) {
    %c0_i32 = arith.constant 0 : i32
    %c0_i32_0 = arith.constant 0 : i32
    %c0_i32_1 = arith.constant 0 : i32
    return %c0_i32, %c0_i32_0 : i32, i32
  }
  func.func @transform_6(%arg0: i32) -> (i32, i32) {
    %c0_i32 = arith.constant 0 : i32
    %c0_i32_0 = arith.constant 0 : i32
    %c0_i32_1 = arith.constant 0 : i32
    return %c0_i32, %c0_i32_0 : i32, i32
  }
  func.func @transform_7(%arg0: i32) -> (i32, i32) {
    %c0_i32 = arith.constant 0 : i32
    %c0_i32_0 = arith.constant 0 : i32
    %c0_i32_1 = arith.constant 0 : i32
    return %c0_i32, %c0_i32_0 : i32, i32
  }
  func.func @transform_8(%arg0: i32) -> (i32, i32) {
    %c0_i32 = arith.constant 0 : i32
    %c0_i32_0 = arith.constant 0 : i32
    %c0_i32_1 = arith.constant 0 : i32
    return %c0_i32, %c0_i32_0 : i32, i32
  }
  func.func @transform_9(%arg0: i32) -> (i32, i32) {
    %c0_i32 = arith.constant 0 : i32
    %c0_i32_0 = arith.constant 0 : i32
    return %arg0, %c0_i32 : i32, i32
  }
}

</mosaic_0001>

<llo_original>
// kernel: tpu_custom_call.1
$region0: #{tpu_custom_call.1}
  #allocation0 [shape = 'u32[]', space=smem, size = 0x4, offset = 0x4, fixed_abs, tag = 'smem constant byte address 0x4 - core index']
  #allocation1 [shape = 'u32[144,128]{1,0:T(1,128)}', space=vmem, size = 0x12000, scoped, tag = 'internal scratch']
  %s0 = inlined_call_operand.hbm [shape: f32[8,16], index: 0, kind: input, shape index: {}]
  %s1 = inlined_call_operand.hbm [shape: f32[8,8], index: 1, kind: input, shape index: {}]
  %s2 = inlined_call_operand.hbm [shape: bf16[16,256], index: 2, kind: input, shape index: {}]
  %s3 = inlined_call_operand.vmem [shape: bf16[8,256], index: 3, kind: input, shape index: {}]
  %s4 = inlined_call_operand.vmem [shape: f32[1,256], index: 4, kind: input, shape index: {}]
  %s5 = inlined_call_operand.hbm [shape: bf16[256,256], index: 5, kind: input, shape index: {}]
  %s6 = inlined_call_operand.vmem [shape: f32[1,256], index: 6, kind: input, shape index: {}]
  %s7 = inlined_call_operand.hbm [shape: bf16[256,128], index: 7, kind: input, shape index: {}]
  %s8 = inlined_call_operand.vmem [shape: f32[1,128], index: 8, kind: input, shape index: {}]
  %s9 = inlined_call_operand.hbm [shape: f32[8,128], index: 9, kind: output, shape index: {}]
  %s10 = sld [smem:[#allocation0]]
  $region66: #{tpu_custom_call.1} parent=0
    _
  %s12 = ssub.s32 1, %s10
  %s13 = scalar_select 0, %s12, %s10
  $region1: #{tpu_custom_call.1} parent=0
    #allocation2 [shape = 'u8[4096]{0}', space=vmem, size = 0x1000, scoped, tag = 'input window, operand 0, single buffered']
    #allocation3 [shape = 's32[1]{0}', space=sflag, size = 0x4, scoped, tag = 'scoped memory for tpu_custom_call.1']
    #allocation4 [shape = 's32[1]{0}', space=sflag, size = 0x4, scoped, tag = 'scoped memory for tpu_custom_call.1']
    #allocation5 [shape = 'u8[4096]{0}', space=vmem, size = 0x1000, scoped, tag = 'input window, operand 1, single buffered']
    #allocation6 [shape = 's32[1]{0}', space=sflag, size = 0x4, scoped, tag = 'scoped memory for tpu_custom_call.1']
    #allocation7 [shape = 'u8[8192]{0}', space=vmem, size = 0x2000, scoped, tag = 'input window, operand 2, single buffered']
    #allocation8 [shape = 'u8[131072]{0}', space=vmem, size = 0x20000, scoped, tag = 'input window, operand 5, single buffered']
    #allocation9 [shape = 's32[1]{0}', space=sflag, size = 0x4, scoped, tag = 'scoped memory for tpu_custom_call.1']
    #allocation10 [shape = 'u8[65536]{0}', space=vmem, size = 0x10000, scoped, tag = 'input window, operand 7, single buffered']
    #allocation11 [shape = 'u8[4096]{0}', space=vmem, size = 0x1000, scoped, tag = 'output window, operand 0, single buffered']
    %14 = vsyncpa [#allocation3], 0
    %15 = vsyncpa [#allocation6], 0
    %16 = vsyncpa [#allocation9], 0
    %17 = vsyncpa [#allocation4], 0
    // Predicated region
    $region2: #{tpu_custom_call.1} parent=1 // pred_check
      _
    $region3: #{tpu_custom_call.1} parent=1 // pred_check_branch
      %19 = sbr.rel (0) target = $region5
    $region4: #{tpu_custom_call.1} parent=1 // pred_region
      %s21 = ssub.s32 128, 128
      %22 = vsyncadd [#allocation3], %s21
      %s24 = sshll.u32 [#allocation2], 4
      %s25 = int_to_ptr.vmem [resolvable:$true] %s24
      %27 = dma.hbm_to_vmem [thread:$0]  %s0, 128, %s25, [#allocation3]
    $region5: #{tpu_custom_call.1} parent=1 // pred_fallthru
      _
    // Predicated region
    $region6: #{tpu_custom_call.1} parent=1 // pred_check
      _
    $region7: #{tpu_custom_call.1} parent=1 // pred_check_branch
      %29 = sbr.rel (0) target = $region9
    $region8: #{tpu_custom_call.1} parent=1 // pred_region
      %s31 = ssub.s32 128, 128
      %32 = vsyncadd [#allocation6], %s31
      %s34 = sshll.u32 [#allocation5], 4
      %s35 = int_to_ptr.vmem [resolvable:$true] %s34
      %37 = dma.hbm_to_vmem [thread:$0]  %s1, 128, %s35, [#allocation6]
    $region9: #{tpu_custom_call.1} parent=1 // pred_fallthru
      _
    // Predicated region
    $region10: #{tpu_custom_call.1} parent=1 // pred_check
      _
    $region11: #{tpu_custom_call.1} parent=1 // pred_check_branch
      %39 = sbr.rel (0) target = $region13
    $region12: #{tpu_custom_call.1} parent=1 // pred_region
      %s41 = ssub.s32 256, 256
      %42 = vsyncadd [#allocation6], %s41
      %s43 = sshll.u32 [#allocation7], 4
      %s44 = int_to_ptr.vmem [resolvable:$true] %s43
      %49 = dma.hbm_to_vmem [thread:$0]  %s2, 256, %s44, [#allocation6], 128, 128, 8
    $region13: #{tpu_custom_call.1} parent=1 // pred_fallthru
      _
    // Predicated region
    $region14: #{tpu_custom_call.1} parent=1 // pred_check
      _
    $region15: #{tpu_custom_call.1} parent=1 // pred_check_branch
      %51 = sbr.rel (0) target = $region17
    $region16: #{tpu_custom_call.1} parent=1 // pred_region
      _
    $region17: #{tpu_custom_call.1} parent=1 // pred_fallthru
      _
    // Predicated region
    $region18: #{tpu_custom_call.1} parent=1 // pred_check
      _
    $region19: #{tpu_custom_call.1} parent=1 // pred_check_branch
      %53 = sbr.rel (0) target = $region21
    $region20: #{tpu_custom_call.1} parent=1 // pred_region
      _
    $region21: #{tpu_custom_call.1} parent=1 // pred_fallthru
      _
    // Predicated region
    $region22: #{tpu_custom_call.1} parent=1 // pred_check
      _
    $region23: #{tpu_custom_call.1} parent=1 // pred_check_branch
      %55 = sbr.rel (0) target = $region25
    $region24: #{tpu_custom_call.1} parent=1 // pred_region
      %s57 = ssub.s32 4096, 4096
      %58 = vsyncadd [#allocation9], %s57
      %s59 = sshll.u32 [#allocation8], 4
      %s60 = int_to_ptr.vmem [resolvable:$true] %s59
      %65 = dma.hbm_to_vmem [thread:$0]  %s5, 4096, %s60, [#allocation9], 128, 128, 8
    $region25: #{tpu_custom_call.1} parent=1 // pred_fallthru
      _
    // Predicated region
    $region26: #{tpu_custom_call.1} parent=1 // pred_check
      _
    $region27: #{tpu_custom_call.1} parent=1 // pred_check_branch
      %67 = sbr.rel (0) target = $region29
    $region28: #{tpu_custom_call.1} parent=1 // pred_region
      _
    $region29: #{tpu_custom_call.1} parent=1 // pred_fallthru
      _
    // Predicated region
    $region30: #{tpu_custom_call.1} parent=1 // pred_check
      _
    $region31: #{tpu_custom_call.1} parent=1 // pred_check_branch
      %69 = sbr.rel (0) target = $region33
    $region32: #{tpu_custom_call.1} parent=1 // pred_region
      %s71 = ssub.s32 2048, 2048
      %72 = vsyncadd [#allocation9], %s71
      %s73 = sshll.u32 [#allocation10], 4
      %s74 = int_to_ptr.vmem [resolvable:$true] %s73
      %79 = dma.hbm_to_vmem [thread:$0]  %s7, 2048, %s74, [#allocation9], 64, 64, 4
    $region33: #{tpu_custom_call.1} parent=1 // pred_fallthru
      _
    // Predicated region
    $region34: #{tpu_custom_call.1} parent=1 // pred_check
      _
    $region35: #{tpu_custom_call.1} parent=1 // pred_check_branch
      %81 = sbr.rel (0) target = $region37
    $region36: #{tpu_custom_call.1} parent=1 // pred_region
      _
    $region37: #{tpu_custom_call.1} parent=1 // pred_fallthru
      _
    // Predicated region
    $region38: #{tpu_custom_call.1} parent=1 // pred_check
      _
    $region39: #{tpu_custom_call.1} parent=1 // pred_check_branch
      %83 = sbr.rel (0) target = $region41
    $region40: #{tpu_custom_call.1} parent=1 // pred_region
      %84 = dma.done [#allocation3], 128
    $region41: #{tpu_custom_call.1} parent=1 // pred_fallthru
      _
    // Predicated region
    $region42: #{tpu_custom_call.1} parent=1 // pred_check
      _
    $region43: #{tpu_custom_call.1} parent=1 // pred_check_branch
      %86 = sbr.rel (0) target = $region45
    $region44: #{tpu_custom_call.1} parent=1 // pred_region
      %87 = dma.done [#allocation6], 128
    $region45: #{tpu_custom_call.1} parent=1 // pred_fallthru
      _
    // Predicated region
    $region46: #{tpu_custom_call.1} parent=1 // pred_check
      _
    $region47: #{tpu_custom_call.1} parent=1 // pred_check_branch
      %89 = sbr.rel (0) target = $region49
    $region48: #{tpu_custom_call.1} parent=1 // pred_region
      %90 = dma.done [#allocation6], 256
    $region49: #{tpu_custom_call.1} parent=1 // pred_fallthru
      _
    // Predicated region
    $region50: #{tpu_custom_call.1} parent=1 // pred_check
      _
    $region51: #{tpu_custom_call.1} parent=1 // pred_check_branch
      %92 = sbr.rel (0) target = $region53
    $region52: #{tpu_custom_call.1} parent=1 // pred_region
      %93 = dma.done [#allocation9], 4096
    $region53: #{tpu_custom_call.1} parent=1 // pred_fallthru
      _
    // Predicated region
    $region54: #{tpu_custom_call.1} parent=1 // pred_check
      _
    $region55: #{tpu_custom_call.1} parent=1 // pred_check_branch
      %95 = sbr.rel (0) target = $region57
    $region56: #{tpu_custom_call.1} parent=1 // pred_region
      %96 = dma.done [#allocation9], 2048
    $region57: #{tpu_custom_call.1} parent=1 // pred_fallthru
      _
    %v98 = vld [vmem:[#allocation2] sm:$0xff]
    %v99 = vpack.c.bf16 %v98, %v98
    %v100 = vld [vmem:[#allocation5] sm:$0xff]
    %v101 = vpack.c.bf16 %v100, %v100
    %v102 = vld [vmem:[#allocation7] sm:$0xff]
    %v103 = vld [vmem:[#allocation7 + $0x8] sm:$0xff]
    %v104 = vld [vmem:[%s3] sm:$0xff]
    %v106 = vunpack.c.l.b16 %v104
    %v107 = vunpack.c.h.b16 %v104
    %v108 = vpack.c.b16 %v106, %v106
    %v109 = vpack.c.b16 %v107, %v107
    %vm110 = vcmask 64512
    %v112 = vsel %vm110, %v101, 0
    %vm114 = vcmask 1043456
    %v116 = vsel %vm114, %v108, 0
    %v119 = vsel %vm114, %v109, 0
    %121 = vmatprep.subr.bf16.mxu0 %v119
    %122 = vmatpush1.bf16.msra.mxu0 %v116
    %123 = vmatprep.subr.bf16.mxu0 0
    %124 = vmatpush1.bf16.msra.mxu0 0
    %125 = vmatprep.subr.bf16.mxu0 0
    %126 = vmatpush1.bf16.msra.mxu0 0
    %127 = vmatprep.subr.bf16.mxu0 0
    %128 = vmatpush1.bf16.msra.mxu0 0
    %129 = vmatprep.subr.bf16.mxu0 0
    %130 = vmatpush1.bf16.msra.mxu0 0
    %131 = vmatprep.subr.bf16.mxu0 0
    %132 = vmatpush1.bf16.msra.mxu0 0
    %133 = vmatprep.subr.bf16.mxu0 0
    %134 = vmatpush1.bf16.msra.mxu0 0
    %135 = vmatprep.subr.bf16.mxu0 0
    %136 = vmatpush1.bf16.msra.mxu0 0
    %137 = vmatprep.subr.bf16.mxu0 0
    %138 = vmatpush1.bf16.msra.mxu0 0
    %139 = vmatprep.subr.bf16.mxu0 0
    %140 = vmatpush1.bf16.msra.mxu0 0
    %141 = vmatprep.subr.bf16.mxu0 0
    %142 = vmatpush1.bf16.msra.mxu0 0
    %143 = vmatprep.subr.bf16.mxu0 0
    %144 = vmatpush1.bf16.msra.mxu0 0
    %145 = vmatprep.subr.bf16.mxu0 0
    %146 = vmatpush1.bf16.msra.mxu0 0
    %147 = vmatprep.subr.bf16.mxu0 0
    %148 = vmatpush1.bf16.msra.mxu0 0
    %149 = vmatprep.subr.bf16.mxu0 0
    %150 = vmatpush1.bf16.msra.mxu0 0
    %151 = vmatprep.subr.bf16.mxu0 0
    %152 = vmatpush1.bf16.msra.mxu0 0
    %153 = vmatprep.mubr.bf16.mxu0 0
    %154 = vmatmul.mubr.bf16.gmra.mrb[0].mxu0 %v112
    %v155 = vpop.f32.mrb[0].mxu0
    %v156 = vadd.f32 0.0, %v155
    %v157 = vpop.f32.mrb[0].mxu0
    %v158 = vadd.f32 0.0, %v157
    %v159 = vpop.f32.mrb[0].mxu0
    %v160 = vpop.f32.mrb[0].mxu0
    %161 = vdwg.mxu0
    %v164 = vunpack.c.l.b16 %v102
    %v165 = vunpack.c.h.b16 %v102
    %v166 = vunpack.c.l.b16 %v103
    %v167 = vunpack.c.h.b16 %v103
    %v168 = vpack.c.b16 %v166, %v164
    %v169 = vpack.c.b16 %v167, %v165
    %vm172 = vcmask 130048
    %v174 = vsel %vm172, %v99, 0
    %176 = vmatprep.subr.bf16.mxu0 %v169
    %177 = vmatpush1.bf16.msra.mxu0 %v168
    %178 = vmatprep.subr.bf16.mxu0 0
    %179 = vmatpush1.bf16.msra.mxu0 0
    %180 = vmatprep.subr.bf16.mxu0 0
    %181 = vmatpush1.bf16.msra.mxu0 0
    %182 = vmatprep.subr.bf16.mxu0 0
    %183 = vmatpush1.bf16.msra.mxu0 0
    %184 = vmatprep.subr.bf16.mxu0 0
    %185 = vmatpush1.bf16.msra.mxu0 0
    %186 = vmatprep.subr.bf16.mxu0 0
    %187 = vmatpush1.bf16.msra.mxu0 0
    %188 = vmatprep.subr.bf16.mxu0 0
    %189 = vmatpush1.bf16.msra.mxu0 0
    %190 = vmatprep.subr.bf16.mxu0 0
    %191 = vmatpush1.bf16.msra.mxu0 0
    %192 = vmatprep.subr.bf16.mxu0 0
    %193 = vmatpush1.bf16.msra.mxu0 0
    %194 = vmatprep.subr.bf16.mxu0 0
    %195 = vmatpush1.bf16.msra.mxu0 0
    %196 = vmatprep.subr.bf16.mxu0 0
    %197 = vmatpush1.bf16.msra.mxu0 0
    %198 = vmatprep.subr.bf16.mxu0 0
    %199 = vmatpush1.bf16.msra.mxu0 0
    %200 = vmatprep.subr.bf16.mxu0 0
    %201 = vmatpush1.bf16.msra.mxu0 0
    %202 = vmatprep.subr.bf16.mxu0 0
    %203 = vmatpush1.bf16.msra.mxu0 0
    %204 = vmatprep.subr.bf16.mxu0 0
    %205 = vmatpush1.bf16.msra.mxu0 0
    %206 = vmatprep.subr.bf16.mxu0 0
    %207 = vmatpush1.bf16.msra.mxu0 0
    %208 = vmatprep.mubr.bf16.mxu0 0
    %209 = vmatmul.mubr.bf16.gmra.mrb[0].mxu0 %v174
    %v210 = vpop.f32.mrb[0].mxu0
    %v211 = vadd.f32 %v156, %v210
    %v212 = vpop.f32.mrb[0].mxu0
    %v213 = vadd.f32 %v158, %v212
    %v214 = vpop.f32.mrb[0].mxu0
    %v215 = vpop.f32.mrb[0].mxu0
    %216 = vdwg.mxu0
    %v217 = vld [vmem:[%s4] sm:$0x3]
    %v219 = vlaneseq
    %v220 = vshrl.u32 %v219, 7
    %v221 = vsub.s32 0, %v220
    %v222 = vrot.slane %v217, %v221
    %v223 = vlaneseq
    %v224 = vshrl.u32 %v223, 7
    %v225 = vsub.s32 1, %v224
    %v226 = vrot.slane %v217, %v225
    %v229 = vadd.f32 %v211, %v222
    %v230 = vadd.f32 %v213, %v226
    %vm231 = vcmp.gt.f32.partialorder %v229, 0.0
    %vm232 = vcmp.gt.f32.partialorder %v230, 0.0
    %v233 = vmul.f32 %v229, 0.01
    %v234 = vmul.f32 %v230, 0.01
    %v235 = vsel %vm231, %v229, %v233
    %v236 = vsel %vm232, %v230, %v234
    %v237 = vpack.c.bf16 %v235, %v235
    %v238 = vpack.c.bf16 %v236, %v236
    %v239 = vld [vmem:[#allocation8] sm:$0xff]
    %v240 = vld [vmem:[#allocation8 + $0x8] sm:$0xff]
    %v241 = vld [vmem:[#allocation8 + $0x10] sm:$0xff]
    %v242 = vld [vmem:[#allocation8 + $0x18] sm:$0xff]
    %v243 = vld [vmem:[#allocation8 + $0x20] sm:$0xff]
    %v244 = vld [vmem:[#allocation8 + $0x28] sm:$0xff]
    %v245 = vld [vmem:[#allocation8 + $0x30] sm:$0xff]
    %v246 = vld [vmem:[#allocation8 + $0x38] sm:$0xff]
    %v247 = vld [vmem:[#allocation8 + $0x40] sm:$0xff]
    %v248 = vld [vmem:[#allocation8 + $0x48] sm:$0xff]
    %v249 = vld [vmem:[#allocation8 + $0x50] sm:$0xff]
    %v250 = vld [vmem:[#allocation8 + $0x58] sm:$0xff]
    %v251 = vld [vmem:[#allocation8 + $0x60] sm:$0xff]
    %v252 = vld [vmem:[#allocation8 + $0x68] sm:$0xff]
    %v253 = vld [vmem:[#allocation8 + $0x70] sm:$0xff]
    %v254 = vld [vmem:[#allocation8 + $0x78] sm:$0xff]
    %v255 = vld [vmem:[#allocation8 + $0x80] sm:$0xff]
    %v256 = vld [vmem:[#allocation8 + $0x88] sm:$0xff]
    %v257 = vld [vmem:[#allocation8 + $0x90] sm:$0xff]
    %v258 = vld [vmem:[#allocation8 + $0x98] sm:$0xff]
    %v259 = vld [vmem:[#allocation8 + $0xa0] sm:$0xff]
    %v260 = vld [vmem:[#allocation8 + $0xa8] sm:$0xff]
    %v261 = vld [vmem:[#allocation8 + $0xb0] sm:$0xff]
    %v262 = vld [vmem:[#allocation8 + $0xb8] sm:$0xff]
    %v263 = vld [vmem:[#allocation8 + $0xc0] sm:$0xff]
    %v264 = vld [vmem:[#allocation8 + $0xc8] sm:$0xff]
    %v265 = vld [vmem:[#allocation8 + $0xd0] sm:$0xff]
    %v266 = vld [vmem:[#allocation8 + $0xd8] sm:$0xff]
    %v267 = vld [vmem:[#allocation8 + $0xe0] sm:$0xff]
    %v268 = vld [vmem:[#allocation8 + $0xe8] sm:$0xff]
    %v269 = vld [vmem:[#allocation8 + $0xf0] sm:$0xff]
    %v270 = vld [vmem:[#allocation8 + $0xf8] sm:$0xff]
    %v271 = vld [vmem:[%s6] sm:$0x3]
    %v273 = vlaneseq
    %v274 = vshrl.u32 %v273, 7
    %v275 = vsub.s32 0, %v274
    %v276 = vrot.slane %v271, %v275
    %v277 = vlaneseq
    %v278 = vshrl.u32 %v277, 7
    %v279 = vsub.s32 1, %v278
    %v280 = vrot.slane %v271, %v279
    %v315 = vunpack.c.l.b16 %v239
    %v316 = vunpack.c.h.b16 %v239
    %v317 = vunpack.c.l.b16 %v240
    %v318 = vunpack.c.h.b16 %v240
    %v319 = vunpack.c.l.b16 %v241
    %v320 = vunpack.c.h.b16 %v241
    %v321 = vunpack.c.l.b16 %v242
    %v322 = vunpack.c.h.b16 %v242
    %v323 = vunpack.c.l.b16 %v243
    %v324 = vunpack.c.h.b16 %v243
    %v325 = vunpack.c.l.b16 %v244
    %v326 = vunpack.c.h.b16 %v244
    %v327 = vunpack.c.l.b16 %v245
    %v328 = vunpack.c.h.b16 %v245
    %v329 = vunpack.c.l.b16 %v246
    %v330 = vunpack.c.h.b16 %v246
    %v331 = vunpack.c.l.b16 %v247
    %v332 = vunpack.c.h.b16 %v247
    %v333 = vunpack.c.l.b16 %v248
    %v334 = vunpack.c.h.b16 %v248
    %v335 = vunpack.c.l.b16 %v249
    %v336 = vunpack.c.h.b16 %v249
    %v337 = vunpack.c.l.b16 %v250
    %v338 = vunpack.c.h.b16 %v250
    %v339 = vunpack.c.l.b16 %v251
    %v340 = vunpack.c.h.b16 %v251
    %v341 = vunpack.c.l.b16 %v252
    %v342 = vunpack.c.h.b16 %v252
    %v343 = vunpack.c.l.b16 %v253
    %v344 = vunpack.c.h.b16 %v253
    %v345 = vunpack.c.l.b16 %v254
    %v346 = vunpack.c.h.b16 %v254
    %v347 = vunpack.c.l.b16 %v255
    %v348 = vunpack.c.h.b16 %v255
    %v349 = vunpack.c.l.b16 %v256
    %v350 = vunpack.c.h.b16 %v256
    %v351 = vunpack.c.l.b16 %v257
    %v352 = vunpack.c.h.b16 %v257
    %v353 = vunpack.c.l.b16 %v258
    %v354 = vunpack.c.h.b16 %v258
    %v355 = vunpack.c.l.b16 %v259
    %v356 = vunpack.c.h.b16 %v259
    %v357 = vunpack.c.l.b16 %v260
    %v358 = vunpack.c.h.b16 %v260
    %v359 = vunpack.c.l.b16 %v261
    %v360 = vunpack.c.h.b16 %v261
    %v361 = vunpack.c.l.b16 %v262
    %v362 = vunpack.c.h.b16 %v262
    %v363 = vunpack.c.l.b16 %v263
    %v364 = vunpack.c.h.b16 %v263
    %v365 = vunpack.c.l.b16 %v264
    %v366 = vunpack.c.h.b16 %v264
    %v367 = vunpack.c.l.b16 %v265
    %v368 = vunpack.c.h.b16 %v265
    %v369 = vunpack.c.l.b16 %v266
    %v370 = vunpack.c.h.b16 %v266
    %v371 = vunpack.c.l.b16 %v267
    %v372 = vunpack.c.h.b16 %v267
    %v373 = vunpack.c.l.b16 %v268
    %v374 = vunpack.c.h.b16 %v268
    %v375 = vunpack.c.l.b16 %v269
    %v376 = vunpack.c.h.b16 %v269
    %v377 = vunpack.c.l.b16 %v270
    %v378 = vunpack.c.h.b16 %v270
    %v379 = vpack.c.b16 %v317, %v315
    %v380 = vpack.c.b16 %v318, %v316
    %v381 = vpack.c.b16 %v321, %v319
    %v382 = vpack.c.b16 %v322, %v320
    %v383 = vpack.c.b16 %v325, %v323
    %v384 = vpack.c.b16 %v326, %v324
    %v385 = vpack.c.b16 %v329, %v327
    %v386 = vpack.c.b16 %v330, %v328
    %v387 = vpack.c.b16 %v333, %v331
    %v388 = vpack.c.b16 %v334, %v332
    %v389 = vpack.c.b16 %v337, %v335
    %v390 = vpack.c.b16 %v338, %v336
    %v391 = vpack.c.b16 %v341, %v339
    %v392 = vpack.c.b16 %v342, %v340
    %v393 = vpack.c.b16 %v345, %v343
    %v394 = vpack.c.b16 %v346, %v344
    %v395 = vpack.c.b16 %v349, %v347
    %v396 = vpack.c.b16 %v350, %v348
    %v397 = vpack.c.b16 %v353, %v351
    %v398 = vpack.c.b16 %v354, %v352
    %v399 = vpack.c.b16 %v357, %v355
    %v400 = vpack.c.b16 %v358, %v356
    %v401 = vpack.c.b16 %v361, %v359
    %v402 = vpack.c.b16 %v362, %v360
    %v403 = vpack.c.b16 %v365, %v363
    %v404 = vpack.c.b16 %v366, %v364
    %v405 = vpack.c.b16 %v369, %v367
    %v406 = vpack.c.b16 %v370, %v368
    %v407 = vpack.c.b16 %v373, %v371
    %v408 = vpack.c.b16 %v374, %v372
    %v409 = vpack.c.b16 %v377, %v375
    %v410 = vpack.c.b16 %v378, %v376
    %443 = vmatprep.subr.bf16.mxu0 %v380
    %444 = vmatpush1.bf16.msra.mxu0 %v379
    %445 = vmatprep.subr.bf16.mxu0 %v382
    %446 = vmatpush1.bf16.msra.mxu0 %v381
    %447 = vmatprep.subr.bf16.mxu0 %v384
    %448 = vmatpush1.bf16.msra.mxu0 %v383
    %449 = vmatprep.subr.bf16.mxu0 %v386
    %450 = vmatpush1.bf16.msra.mxu0 %v385
    %451 = vmatprep.subr.bf16.mxu0 %v388
    %452 = vmatpush1.bf16.msra.mxu0 %v387
    %453 = vmatprep.subr.bf16.mxu0 %v390
    %454 = vmatpush1.bf16.msra.mxu0 %v389
    %455 = vmatprep.subr.bf16.mxu0 %v392
    %456 = vmatpush1.bf16.msra.mxu0 %v391
    %457 = vmatprep.subr.bf16.mxu0 %v394
    %458 = vmatpush1.bf16.msra.mxu0 %v393
    %459 = vmatprep.subr.bf16.mxu0 %v396
    %460 = vmatpush1.bf16.msra.mxu0 %v395
    %461 = vmatprep.subr.bf16.mxu0 %v398
    %462 = vmatpush1.bf16.msra.mxu0 %v397
    %463 = vmatprep.subr.bf16.mxu0 %v400
    %464 = vmatpush1.bf16.msra.mxu0 %v399
    %465 = vmatprep.subr.bf16.mxu0 %v402
    %466 = vmatpush1.bf16.msra.mxu0 %v401
    %467 = vmatprep.subr.bf16.mxu0 %v404
    %468 = vmatpush1.bf16.msra.mxu0 %v403
    %469 = vmatprep.subr.bf16.mxu0 %v406
    %470 = vmatpush1.bf16.msra.mxu0 %v405
    %471 = vmatprep.subr.bf16.mxu0 %v408
    %472 = vmatpush1.bf16.msra.mxu0 %v407
    %473 = vmatprep.subr.bf16.mxu0 %v410
    %474 = vmatpush1.bf16.msra.mxu0 %v409
    %475 = vmatprep.mubr.bf16.mxu0 %v238
    %476 = vmatmul.mubr.bf16.gmra.mrb[0].mxu0 %v237
    %v477 = vpop.f32.mrb[0].mxu0
    %v478 = vadd.f32 %v276, %v477
    %v479 = vpop.f32.mrb[0].mxu0
    %v480 = vadd.f32 %v280, %v479
    %v481 = vpop.f32.mrb[0].mxu0
    %v482 = vpop.f32.mrb[0].mxu0
    %483 = vdwg.mxu0
    %vm484 = vcmp.gt.f32.partialorder %v478, 0.0
    %vm485 = vcmp.gt.f32.partialorder %v480, 0.0
    %v486 = vmul.f32 %v478, 0.01
    %v487 = vmul.f32 %v480, 0.01
    %v488 = vsel %vm484, %v478, %v486
    %v489 = vsel %vm485, %v480, %v487
    %v490 = vpack.c.bf16 %v488, %v488
    %v491 = vpack.c.bf16 %v489, %v489
    %v492 = vld [vmem:[#allocation10] sm:$0xf]
    %v493 = vld [vmem:[#allocation10 + $0x4] sm:$0xf]
    %v494 = vld [vmem:[#allocation10 + $0x8] sm:$0xf]
    %v495 = vld [vmem:[#allocation10 + $0xc] sm:$0xf]
    %v496 = vld [vmem:[#allocation10 + $0x10] sm:$0xf]
    %v497 = vld [vmem:[#allocation10 + $0x14] sm:$0xf]
    %v498 = vld [vmem:[#allocation10 + $0x18] sm:$0xf]
    %v499 = vld [vmem:[#allocation10 + $0x1c] sm:$0xf]
    %v500 = vld [vmem:[#allocation10 + $0x20] sm:$0xf]
    %v501 = vld [vmem:[#allocation10 + $0x24] sm:$0xf]
    %v502 = vld [vmem:[#allocation10 + $0x28] sm:$0xf]
    %v503 = vld [vmem:[#allocation10 + $0x2c] sm:$0xf]
    %v504 = vld [vmem:[#allocation10 + $0x30] sm:$0xf]
    %v505 = vld [vmem:[#allocation10 + $0x34] sm:$0xf]
    %v506 = vld [vmem:[#allocation10 + $0x38] sm:$0xf]
    %v507 = vld [vmem:[#allocation10 + $0x3c] sm:$0xf]
    %v508 = vld [vmem:[#allocation10 + $0x40] sm:$0xf]
    %v509 = vld [vmem:[#allocation10 + $0x44] sm:$0xf]
    %v510 = vld [vmem:[#allocation10 + $0x48] sm:$0xf]
    %v511 = vld [vmem:[#allocation10 + $0x4c] sm:$0xf]
    %v512 = vld [vmem:[#allocation10 + $0x50] sm:$0xf]
    %v513 = vld [vmem:[#allocation10 + $0x54] sm:$0xf]
    %v514 = vld [vmem:[#allocation10 + $0x58] sm:$0xf]
    %v515 = vld [vmem:[#allocation10 + $0x5c] sm:$0xf]
    %v516 = vld [vmem:[#allocation10 + $0x60] sm:$0xf]
    %v517 = vld [vmem:[#allocation10 + $0x64] sm:$0xf]
    %v518 = vld [vmem:[#allocation10 + $0x68] sm:$0xf]
    %v519 = vld [vmem:[#allocation10 + $0x6c] sm:$0xf]
    %v520 = vld [vmem:[#allocation10 + $0x70] sm:$0xf]
    %v521 = vld [vmem:[#allocation10 + $0x74] sm:$0xf]
    %v522 = vld [vmem:[#allocation10 + $0x78] sm:$0xf]
    %v523 = vld [vmem:[#allocation10 + $0x7c] sm:$0xf]
    %v524 = vld [vmem:[%s8] sm:$0x1]
    %v526 = vlaneseq
    %v527 = vshrl.u32 %v526, 7
    %v528 = vsub.s32 0, %v527
    %v529 = vrot.slane %v524, %v528
    %v563 = vunpack.c.l.b16 %v492
    %v564 = vunpack.c.l.b16 %v493
    %v565 = vunpack.c.l.b16 %v494
    %v566 = vunpack.c.l.b16 %v495
    %v567 = vunpack.c.l.b16 %v496
    %v568 = vunpack.c.l.b16 %v497
    %v569 = vunpack.c.l.b16 %v498
    %v570 = vunpack.c.l.b16 %v499
    %v571 = vunpack.c.l.b16 %v500
    %v572 = vunpack.c.l.b16 %v501
    %v573 = vunpack.c.l.b16 %v502
    %v574 = vunpack.c.l.b16 %v503
    %v575 = vunpack.c.l.b16 %v504
    %v576 = vunpack.c.l.b16 %v505
    %v577 = vunpack.c.l.b16 %v506
    %v578 = vunpack.c.l.b16 %v507
    %v579 = vunpack.c.l.b16 %v508
    %v580 = vunpack.c.l.b16 %v509
    %v581 = vunpack.c.l.b16 %v510
    %v582 = vunpack.c.l.b16 %v511
    %v583 = vunpack.c.l.b16 %v512
    %v584 = vunpack.c.l.b16 %v513
    %v585 = vunpack.c.l.b16 %v514
    %v586 = vunpack.c.l.b16 %v515
    %v587 = vunpack.c.l.b16 %v516
    %v588 = vunpack.c.l.b16 %v517
    %v589 = vunpack.c.l.b16 %v518
    %v590 = vunpack.c.l.b16 %v519
    %v591 = vunpack.c.l.b16 %v520
    %v592 = vunpack.c.l.b16 %v521
    %v593 = vunpack.c.l.b16 %v522
    %v594 = vunpack.c.l.b16 %v523
    %v595 = vpack.c.b16 %v564, %v563
    %v596 = vpack.c.b16 %v566, %v565
    %v597 = vpack.c.b16 %v568, %v567
    %v598 = vpack.c.b16 %v570, %v569
    %v599 = vpack.c.b16 %v572, %v571
    %v600 = vpack.c.b16 %v574, %v573
    %v601 = vpack.c.b16 %v576, %v575
    %v602 = vpack.c.b16 %v578, %v577
    %v603 = vpack.c.b16 %v580, %v579
    %v604 = vpack.c.b16 %v582, %v581
    %v605 = vpack.c.b16 %v584, %v583
    %v606 = vpack.c.b16 %v586, %v585
    %v607 = vpack.c.b16 %v588, %v587
    %v608 = vpack.c.b16 %v590, %v589
    %v609 = vpack.c.b16 %v592, %v591
    %v610 = vpack.c.b16 %v594, %v593
    %627 = vmatprep.subr.bf16.mxu0 0
    %628 = vmatpush1.bf16.msra.mxu0 %v595
    %629 = vmatprep.subr.bf16.mxu0 0
    %630 = vmatpush1.bf16.msra.mxu0 %v596
    %631 = vmatprep.subr.bf16.mxu0 0
    %632 = vmatpush1.bf16.msra.mxu0 %v597
    %633 = vmatprep.subr.bf16.mxu0 0
    %634 = vmatpush1.bf16.msra.mxu0 %v598
    %635 = vmatprep.subr.bf16.mxu0 0
    %636 = vmatpush1.bf16.msra.mxu0 %v599
    %637 = vmatprep.subr.bf16.mxu0 0
    %638 = vmatpush1.bf16.msra.mxu0 %v600
    %639 = vmatprep.subr.bf16.mxu0 0
    %640 = vmatpush1.bf16.msra.mxu0 %v601
    %641 = vmatprep.subr.bf16.mxu0 0
    %642 = vmatpush1.bf16.msra.mxu0 %v602
    %643 = vmatprep.subr.bf16.mxu0 0
    %644 = vmatpush1.bf16.msra.mxu0 %v603
    %645 = vmatprep.subr.bf16.mxu0 0
    %646 = vmatpush1.bf16.msra.mxu0 %v604
    %647 = vmatprep.subr.bf16.mxu0 0
    %648 = vmatpush1.bf16.msra.mxu0 %v605
    %649 = vmatprep.subr.bf16.mxu0 0
    %650 = vmatpush1.bf16.msra.mxu0 %v606
    %651 = vmatprep.subr.bf16.mxu0 0
    %652 = vmatpush1.bf16.msra.mxu0 %v607
    %653 = vmatprep.subr.bf16.mxu0 0
    %654 = vmatpush1.bf16.msra.mxu0 %v608
    %655 = vmatprep.subr.bf16.mxu0 0
    %656 = vmatpush1.bf16.msra.mxu0 %v609
    %657 = vmatprep.subr.bf16.mxu0 0
    %658 = vmatpush1.bf16.msra.mxu0 %v610
    %659 = vmatprep.mubr.bf16.mxu0 %v491
    %660 = vmatmul.mubr.bf16.gmra.mrb[0].mxu0 %v490
    %v661 = vpop.f32.mrb[0].mxu0
    %v662 = vadd.f32 %v529, %v661
    %v663 = vpop.f32.mrb[0].mxu0
    %v664 = vpop.f32.mrb[0].mxu0
    %v665 = vpop.f32.mrb[0].mxu0
    %666 = vdwg.mxu0
    %667 = vst [vmem:[#allocation11] sm:$0xff] %v662
    // Predicated region
    $region58: #{tpu_custom_call.1} parent=1 // pred_check
      _
    $region59: #{tpu_custom_call.1} parent=1 // pred_check_branch
      %669 = sbr.rel (0) target = $region61
    $region60: #{tpu_custom_call.1} parent=1 // pred_region
      %s671 = ssub.s32 128, 128
      %672 = vsyncadd [#allocation4], %s671
      %s674 = sshll.u32 [#allocation11], 4
      %s675 = int_to_ptr.vmem [resolvable:$true] %s674
      %677 = dma.vmem_to_hbm [thread:$0]  %s675, 128, %s9, [#allocation4]
    $region61: #{tpu_custom_call.1} parent=1 // pred_fallthru
      _
    // Predicated region
    $region62: #{tpu_custom_call.1} parent=1 // pred_check
      _
    $region63: #{tpu_custom_call.1} parent=1 // pred_check_branch
      %679 = sbr.rel (0) target = $region65
    $region64: #{tpu_custom_call.1} parent=1 // pred_region
      %680 = dma.done [#allocation4], 128
    $region65: #{tpu_custom_call.1} parent=1 // pred_fallthru
      _
    %681 = vsyncpa [#allocation3], 1
    %682 = vsyncpa [#allocation6], 1
    %683 = vsyncpa [#allocation9], 1
    %684 = vsyncpa [#allocation4], 1

</llo_original>
